<compile_context>
chip_gen: v7x
topology: tpu7x:2x2x1
jax: 0.10.0
libtpu: 0.0.40
codegen_flags: <defaults>
</compile_context>

<pallas_src>
import functools

import jax
import jax.numpy as jnp
from jax.experimental import pallas as pl
from jax.experimental.pallas import tpu as pltpu

BN_EPS = 1e-5
_LANE = 128


def _round_up(x, m):
    return ((x + m - 1) // m) * m


def _conv_stats_kernel(p_ref, w_ref, y_ref, stats_ref):
    # p_ref:     (TILE_R, K_pad)   bf16 im2col patches for this tile
    # w_ref:     (K_pad, C_pad)    bf16 reshaped conv weight
    # y_ref:     (TILE_R, C_pad)   f32 raw conv output for this tile
    # stats_ref: (8, C_pad)        f32 per-tile [sum; sumsq; 0...] (sublane-aligned)
    y = jnp.dot(p_ref[...], w_ref[...], preferred_element_type=jnp.float32)  # MXU
    y_ref[...] = y
    s1 = jnp.sum(y, axis=0, keepdims=True)          # (1, C) per-channel sum
    s2 = jnp.sum(y * y, axis=0, keepdims=True)      # (1, C) per-channel sum of squares
    pad = jnp.zeros((6, s1.shape[1]), jnp.float32)
    stats_ref[...] = jnp.concatenate([s1, s2, pad], axis=0)


def _bn_apply_kernel(y_ref, stats_ref, gamma_ref, beta_ref, o_ref, *, inv_count):
    # Finalize BN stats (tiny (1, C) vector math) and apply a single fused
    # multiply-add per element: o = y * scale + shift.
    mean = stats_ref[0:1, :] * inv_count                       # (1, C)
    ex2 = stats_ref[1:2, :] * inv_count                        # (1, C)
    var = jnp.maximum(ex2 - mean * mean, 0.0)                  # biased variance
    scale = gamma_ref[...] * jax.lax.rsqrt(var + BN_EPS)       # (1, C)
    shift = beta_ref[...] - mean * scale                       # (1, C)
    o_ref[...] = (y_ref[...] * scale + shift).astype(o_ref.dtype)


def identity_padding_forward(x_nchw, conv_w, bn_gamma, bn_beta, *, stride):
    """x_nchw: (N, Cin, H, W); conv_w: (Cout, Cin, 3, 3); bn_gamma/bn_beta: (Cout,)."""
    N, Cin, H, W = x_nchw.shape
    Cout = conv_w.shape[0]
    Ho = (H + 2 - 3) // stride + 1
    Wo = (W + 2 - 3) // stride + 1
    R = N * Ho * Wo
    K = 9 * Cin

    C_pad = _round_up(Cout, _LANE)               # lane-dense output / MXU N dim
    K_pad = _round_up(K, 8)                      # aligned contraction dim
    tile_r = 512 if R >= 512 else _round_up(R, 8)
    R_pad = _round_up(R, tile_r)
    G = R_pad // tile_r

    # ---- glue: NCHW -> NHWC (bf16), pad=1, im2col, zero-pad to aligned shapes ----
    x = jnp.transpose(x_nchw, (0, 2, 3, 1)).astype(jnp.bfloat16)        # (N, H, W, Cin)
    x_pad = jnp.pad(x, ((0, 0), (1, 1), (1, 1), (0, 0)))
    patches = []
    for dy in range(3):
        for dx in range(3):
            patches.append(
                x_pad[:, dy:dy + Ho * stride:stride, dx:dx + Wo * stride:stride, :]
            )                                                           # (N, Ho, Wo, Cin)
    P = jnp.concatenate(patches, axis=-1).reshape(R, K)                 # bf16 (R, 9*Cin)
    P = jnp.pad(P, ((0, R_pad - R), (0, K_pad - K)))                    # zero rows/cols

    # weight (Cout, Cin, kh, kw) -> (kh, kw, Cin, Cout) -> (9*Cin, Cout), padded
    W2 = jnp.transpose(conv_w, (2, 3, 1, 0)).reshape(K, Cout).astype(jnp.bfloat16)
    W2 = jnp.pad(W2, ((0, K_pad - K), (0, C_pad - Cout)))
    gamma2 = jnp.pad(bn_gamma.astype(jnp.float32), (0, C_pad - Cout)).reshape(1, C_pad)
    beta2 = jnp.pad(bn_beta.astype(jnp.float32), (0, C_pad - Cout)).reshape(1, C_pad)

    # ---- phase 1: tiled conv matmul + per-tile partial BN stats ----
    y, partial_stats = pl.pallas_call(
        _conv_stats_kernel,
        out_shape=(
            jax.ShapeDtypeStruct((R_pad, C_pad), jnp.float32),
            jax.ShapeDtypeStruct((8 * G, C_pad), jnp.float32),
        ),
        grid_spec=pltpu.PrefetchScalarGridSpec(
            num_scalar_prefetch=0,
            grid=(G,),
            in_specs=[
                pl.BlockSpec((tile_r, K_pad), lambda i: (i, 0)),
                pl.BlockSpec((K_pad, C_pad), lambda i: (0, 0)),
            ],
            out_specs=(
                pl.BlockSpec((tile_r, C_pad), lambda i: (i, 0)),
                pl.BlockSpec((8, C_pad), lambda i: (i, 0)),
            ),
        ),
        compiler_params=pltpu.CompilerParams(dimension_semantics=("parallel",)),
    )(P, W2)

    # tiny cross-tile combine of the per-tile stats (G x 8 x C_pad -> 8 x C_pad)
    stats = partial_stats.reshape(G, 8, C_pad).sum(axis=0)

    # ---- phase 2: finalize BN + elementwise apply (aliased in-place over y) ----
    out_flat = pl.pallas_call(
        functools.partial(_bn_apply_kernel, inv_count=1.0 / float(R)),
        out_shape=jax.ShapeDtypeStruct((R_pad, C_pad), jnp.float32),
        grid_spec=pltpu.PrefetchScalarGridSpec(
            num_scalar_prefetch=0,
            grid=(G,),
            in_specs=[
                pl.BlockSpec((tile_r, C_pad), lambda i: (i, 0)),
                pl.BlockSpec((8, C_pad), lambda i: (0, 0)),
                pl.BlockSpec((1, C_pad), lambda i: (0, 0)),
                pl.BlockSpec((1, C_pad), lambda i: (0, 0)),
            ],
            out_specs=pl.BlockSpec((tile_r, C_pad), lambda i: (i, 0)),
        ),
        input_output_aliases={0: 0},
        compiler_params=pltpu.CompilerParams(dimension_semantics=("parallel",)),
    )(y, stats, gamma2, beta2)

    # ---- glue: slice off padding, back to NCHW ----
    out = out_flat[:R, :Cout].reshape(N, Ho, Wo, Cout)
    return jnp.transpose(out, (0, 3, 1, 2))                             # (N, Cout, Ho, Wo)


def _reference_forward(x_nchw, conv_w, bn_gamma, bn_beta, *, stride):
    """Pure-JAX f32 reference (conv + training-mode BN) for correctness checking."""
    y = jax.lax.conv_general_dilated(
        x_nchw.astype(jnp.float32), conv_w.astype(jnp.float32),
        window_strides=(stride, stride), padding=((1, 1), (1, 1)),
        dimension_numbers=("NCHW", "OIHW", "NCHW"),
    )
    mean = jnp.mean(y, axis=(0, 2, 3), keepdims=True)
    var = jnp.mean((y - mean) ** 2, axis=(0, 2, 3), keepdims=True)
    y_hat = (y - mean) * jax.lax.rsqrt(var + BN_EPS)
    return y_hat * bn_gamma.reshape(1, -1, 1, 1) + bn_beta.reshape(1, -1, 1, 1)


if __name__ == "__main__":
    key = jax.random.PRNGKey(0)
    k_x, k_w = jax.random.split(key)

    N, Cin, H, W = 2, 4, 16, 16
    Cout, stride = 8, 2

    x = jax.random.normal(k_x, (N, Cin, H, W), dtype=jnp.float32)
    conv_w = jax.random.normal(k_w, (Cout, Cin, 3, 3), dtype=jnp.float32) * 0.1
    bn_gamma = jnp.ones((Cout,), dtype=jnp.float32)   # PyTorch BatchNorm2d default init
    bn_beta = jnp.zeros((Cout,), dtype=jnp.float32)

    out = identity_padding_forward(x, conv_w, bn_gamma, bn_beta, stride=stride)
    out = jax.block_until_ready(out)

    ref = _reference_forward(x, conv_w, bn_gamma, bn_beta, stride=stride)
    assert out.shape == (N, Cout, H // stride, W // stride), out.shape
    # bf16 MXU operands vs f32 reference -> loosened tolerance
    assert jnp.allclose(out, ref, atol=2e-2, rtol=2e-2), "mismatch vs reference"

    print("KERNEL_OK")
</pallas_src>

<mosaic_0001>
module attributes {stable_mosaic.version = 11 : i64} {
  func.func @_conv_stats_kernel(%arg0: i32, %arg1: memref<128x40xbf16, #tpu.memory_space<vmem>>, %arg2: memref<40x128xbf16, #tpu.memory_space<vmem>>, %arg3: memref<128x128xf32, #tpu.memory_space<vmem>>, %arg4: memref<8x128xf32, #tpu.memory_space<vmem>>) attributes {dimension_semantics = [#tpu.dimension_semantics<parallel>], iteration_bounds = array<i64: 1>, scalar_prefetch = 0 : i64, scratch_operands = 0 : i64, tpu.core_type = #tpu.core_type<tc>, window_params = [{transform_indices = @transform_0, window_bounds = array<i64: 128, 40>}, {pipeline_mode = #tpu.pipeline_mode<synchronous>, transform_indices = @transform_1, window_bounds = array<i64: 40, 128>}, {transform_indices = @transform_2, window_bounds = array<i64: 128, 128>}, {transform_indices = @transform_3, window_bounds = array<i64: 8, 128>}]} {
    %c0 = arith.constant 0 : index
    %c0_0 = arith.constant 0 : index
    %0 = vector.load %arg1[%c0, %c0_0] : memref<128x40xbf16, #tpu.memory_space<vmem>>, vector<128x40xbf16>
    %c0_1 = arith.constant 0 : index
    %c0_2 = arith.constant 0 : index
    %1 = vector.load %arg2[%c0_1, %c0_2] : memref<40x128xbf16, #tpu.memory_space<vmem>>, vector<40x128xbf16>
    %cst = arith.constant dense<0.000000e+00> : vector<128x128xf32>
    %2 = tpu.matmul %0, %1, %cst {dimension_numbers = #tpu.dot_dimension_numbers<[1], [0], [0], [1], [0, 0, 1, 1], [], []>} : vector<128x40xbf16>, vector<40x128xbf16>, vector<128x128xf32> -> vector<128x128xf32>
    %c0_3 = arith.constant 0 : index
    %c0_4 = arith.constant 0 : index
    %3 = vector.load %arg3[%c0_3, %c0_4] : memref<128x128xf32, #tpu.memory_space<vmem>>, vector<128x128xf32>
    tpu.vector_store %arg3[%c0_3, %c0_4], %2 {strides = array<i32>} : memref<128x128xf32, #tpu.memory_space<vmem>>, vector<128x128xf32>,
    %cst_5 = arith.constant dense<0.000000e+00> : vector<128xf32>
    %4 = vector.multi_reduction <add>, %2, %cst_5 [0] : vector<128x128xf32> to vector<128xf32>
    %5 = vector.shape_cast %4 : vector<128xf32> to vector<1x128xf32>
    %6 = arith.mulf %2, %2 : vector<128x128xf32>
    %cst_6 = arith.constant dense<0.000000e+00> : vector<128xf32>
    %7 = vector.multi_reduction <add>, %6, %cst_6 [0] : vector<128x128xf32> to vector<128xf32>
    %8 = vector.shape_cast %7 : vector<128xf32> to vector<1x128xf32>
    %cst_7 = arith.constant 0.000000e+00 : f32
    %9 = vector.broadcast %cst_7 : f32 to vector<6x128xf32>
    %10 = tpu.concatenate %5, %8, %9 in 0 : vector<1x128xf32>, vector<1x128xf32>, vector<6x128xf32> -> vector<8x128xf32>
    %c0_8 = arith.constant 0 : index
    %c0_9 = arith.constant 0 : index
    %11 = vector.load %arg4[%c0_8, %c0_9] : memref<8x128xf32, #tpu.memory_space<vmem>>, vector<8x128xf32>
    tpu.vector_store %arg4[%c0_8, %c0_9], %10 {strides = array<i32>} : memref<8x128xf32, #tpu.memory_space<vmem>>, vector<8x128xf32>,
    return
  }
  func.func @transform_0(%arg0: i32) -> (i32, i32) {
    %c0_i32 = arith.constant 0 : i32
    %c0_i32_0 = arith.constant 0 : i32
    return %arg0, %c0_i32 : i32, i32
  }
  func.func @transform_1(%arg0: i32) -> (i32, i32) {
    %c0_i32 = arith.constant 0 : i32
    %c0_i32_0 = arith.constant 0 : i32
    %c0_i32_1 = arith.constant 0 : i32
    return %c0_i32, %c0_i32_0 : i32, i32
  }
  func.func @transform_2(%arg0: i32) -> (i32, i32) {
    %c0_i32 = arith.constant 0 : i32
    %c0_i32_0 = arith.constant 0 : i32
    return %arg0, %c0_i32 : i32, i32
  }
  func.func @transform_3(%arg0: i32) -> (i32, i32) {
    %c0_i32 = arith.constant 0 : i32
    %c0_i32_0 = arith.constant 0 : i32
    return %arg0, %c0_i32 : i32, i32
  }
}

</mosaic_0001>

<llo_original>
// kernel: tpu_custom_call.1
$region0: #{tpu_custom_call.1}
  #allocation0 [shape = 'u32[]', space=smem, size = 0x4, offset = 0x4, fixed_abs, tag = 'smem constant byte address 0x4 - core index']
  #allocation1 [shape = 'u32[144,128]{1,0:T(1,128)}', space=vmem, size = 0x12000, scoped, tag = 'internal scratch']
  %s0 = inlined_call_operand.vmem [shape: bf16[128,40], index: 0, kind: input, shape index: {}]
  %s1 = inlined_call_operand.vmem [shape: bf16[40,128], index: 1, kind: input, shape index: {}]
  %s2 = inlined_call_operand.hbm [shape: f32[128,128], index: 2, kind: output, shape index: {0}]
  %s3 = inlined_call_operand.hbm [shape: f32[8,128], index: 3, kind: output, shape index: {1}]
  %4 = xla_tuple %s2, %s3
  %s5 = sld [smem:[#allocation0]]
  $region26: #{tpu_custom_call.1} parent=0
    _
  %s7 = ssub.s32 1, %s5
  %s8 = scalar_select 0, %s7, %s5
  $region1: #{tpu_custom_call.1} parent=0
    #allocation2 [shape = 'u8[65536]{0}', space=vmem, size = 0x10000, scoped, tag = 'output window, operand 0, single buffered']
    #allocation3 [shape = 's32[1]{0}', space=sflag, size = 0x4, scoped, tag = 'scoped memory for tpu_custom_call.1']
    #allocation4 [shape = 'u8[4096]{0}', space=vmem, size = 0x1000, scoped, tag = 'output window, operand 1, single buffered']
    #allocation5 [shape = 's32[1]{0}', space=sflag, size = 0x4, scoped, tag = 'scoped memory for tpu_custom_call.1']
    %9 = vsyncpa [#allocation3], 0
    %10 = vsyncpa [#allocation5], 0
    // Predicated region
    $region2: #{tpu_custom_call.1} parent=1 // pred_check
      _
    $region3: #{tpu_custom_call.1} parent=1 // pred_check_branch
      %12 = sbr.rel (0) target = $region5
    $region4: #{tpu_custom_call.1} parent=1 // pred_region
      _
    $region5: #{tpu_custom_call.1} parent=1 // pred_fallthru
      _
    // Predicated region
    $region6: #{tpu_custom_call.1} parent=1 // pred_check
      _
    $region7: #{tpu_custom_call.1} parent=1 // pred_check_branch
      %14 = sbr.rel (0) target = $region9
    $region8: #{tpu_custom_call.1} parent=1 // pred_region
      _
    $region9: #{tpu_custom_call.1} parent=1 // pred_fallthru
      _
    %v16 = vld [vmem:[%s0] sm:$0xf]
    %v17 = vld [vmem:[%s0 + $0x4] sm:$0xf]
    %v18 = vld [vmem:[%s0 + $0x8] sm:$0xf]
    %v19 = vld [vmem:[%s0 + $0xc] sm:$0xf]
    %v20 = vld [vmem:[%s0 + $0x10] sm:$0xf]
    %v21 = vld [vmem:[%s0 + $0x14] sm:$0xf]
    %v22 = vld [vmem:[%s0 + $0x18] sm:$0xf]
    %v23 = vld [vmem:[%s0 + $0x1c] sm:$0xf]
    %v24 = vld [vmem:[%s0 + $0x20] sm:$0xf]
    %v25 = vld [vmem:[%s0 + $0x24] sm:$0xf]
    %v26 = vld [vmem:[%s0 + $0x28] sm:$0xf]
    %v27 = vld [vmem:[%s0 + $0x2c] sm:$0xf]
    %v28 = vld [vmem:[%s0 + $0x30] sm:$0xf]
    %v29 = vld [vmem:[%s0 + $0x34] sm:$0xf]
    %v30 = vld [vmem:[%s0 + $0x38] sm:$0xf]
    %v31 = vld [vmem:[%s0 + $0x3c] sm:$0xf]
    %v32 = vld [vmem:[%s1] sm:$0xf]
    %v33 = vld [vmem:[%s1 + $0x4] sm:$0xf]
    %v34 = vld [vmem:[%s1 + $0x8] sm:$0xf]
    %v35 = vld [vmem:[%s1 + $0xc] sm:$0xf]
    %v36 = vld [vmem:[%s1 + $0x10] sm:$0xf]
    %v53 = vunpack.c.l.b16 %v16
    %v54 = vunpack.c.l.b16 %v17
    %v55 = vunpack.c.l.b16 %v18
    %v56 = vunpack.c.l.b16 %v19
    %v57 = vunpack.c.l.b16 %v20
    %v58 = vunpack.c.l.b16 %v21
    %v59 = vunpack.c.l.b16 %v22
    %v60 = vunpack.c.l.b16 %v23
    %v61 = vunpack.c.l.b16 %v24
    %v62 = vunpack.c.l.b16 %v25
    %v63 = vunpack.c.l.b16 %v26
    %v64 = vunpack.c.l.b16 %v27
    %v65 = vunpack.c.l.b16 %v28
    %v66 = vunpack.c.l.b16 %v29
    %v67 = vunpack.c.l.b16 %v30
    %v68 = vunpack.c.l.b16 %v31
    %v69 = vpack.c.b16 %v54, %v53
    %v70 = vpack.c.b16 %v56, %v55
    %v71 = vpack.c.b16 %v58, %v57
    %v72 = vpack.c.b16 %v60, %v59
    %v73 = vpack.c.b16 %v62, %v61
    %v74 = vpack.c.b16 %v64, %v63
    %v75 = vpack.c.b16 %v66, %v65
    %v76 = vpack.c.b16 %v68, %v67
    %v82 = vunpack.c.l.b16 %v32
    %v83 = vunpack.c.l.b16 %v33
    %v84 = vunpack.c.l.b16 %v34
    %v85 = vunpack.c.l.b16 %v35
    %v86 = vunpack.c.l.b16 %v36
    %v87 = vpack.c.b16 %v83, %v82
    %v88 = vpack.c.b16 %v85, %v84
    %v89 = vpack.c.b16 %v86, %v86
    %vm92 = vcmask 326656
    %v94 = vsel %vm92, %v69, 0
    %v97 = vsel %vm92, %v70, 0
    %v100 = vsel %vm92, %v71, 0
    %v103 = vsel %vm92, %v72, 0
    %v106 = vsel %vm92, %v73, 0
    %v109 = vsel %vm92, %v74, 0
    %v112 = vsel %vm92, %v75, 0
    %v115 = vsel %vm92, %v76, 0
    %vm117 = vcmask 1043456
    %v119 = vsel %vm117, %v89, 0
    %121 = vmatprep.subr.bf16.mxu0 0
    %122 = vmatpush1.bf16.msra.mxu0 %v87
    %123 = vmatprep.subr.bf16.mxu0 0
    %124 = vmatpush1.bf16.msra.mxu0 %v88
    %125 = vmatprep.subr.bf16.mxu0 0
    %126 = vmatpush1.bf16.msra.mxu0 %v119
    %127 = vmatprep.subr.bf16.mxu0 0
    %128 = vmatpush1.bf16.msra.mxu0 0
    %129 = vmatprep.subr.bf16.mxu0 0
    %130 = vmatpush1.bf16.msra.mxu0 0
    %131 = vmatprep.subr.bf16.mxu0 0
    %132 = vmatpush1.bf16.msra.mxu0 0
    %133 = vmatprep.subr.bf16.mxu0 0
    %134 = vmatpush1.bf16.msra.mxu0 0
    %135 = vmatprep.subr.bf16.mxu0 0
    %136 = vmatpush1.bf16.msra.mxu0 0
    %137 = vmatprep.subr.bf16.mxu0 0
    %138 = vmatpush1.bf16.msra.mxu0 0
    %139 = vmatprep.subr.bf16.mxu0 0
    %140 = vmatpush1.bf16.msra.mxu0 0
    %141 = vmatprep.subr.bf16.mxu0 0
    %142 = vmatpush1.bf16.msra.mxu0 0
    %143 = vmatprep.subr.bf16.mxu0 0
    %144 = vmatpush1.bf16.msra.mxu0 0
    %145 = vmatprep.subr.bf16.mxu0 0
    %146 = vmatpush1.bf16.msra.mxu0 0
    %147 = vmatprep.subr.bf16.mxu0 0
    %148 = vmatpush1.bf16.msra.mxu0 0
    %149 = vmatprep.subr.bf16.mxu0 0
    %150 = vmatpush1.bf16.msra.mxu0 0
    %151 = vmatprep.subr.bf16.mxu0 0
    %152 = vmatpush1.bf16.msra.mxu0 0
    %153 = vmatprep.mubr.bf16.mxu0 0
    %154 = vmatmul.mubr.bf16.gmra.mrb[0].mxu0 %v94
    %v155 = vpop.f32.mrb[0].mxu0
    %v156 = vadd.f32 0.0, %v155
    %v157 = vpop.f32.mrb[0].mxu0
    %v158 = vpop.f32.mrb[0].mxu0
    %v159 = vadd.f32 0.0, %v158
    %v160 = vpop.f32.mrb[0].mxu0
    %161 = vmatprep.mubr.bf16.mxu0 0
    %162 = vmatmul.mubr.bf16.gmra.mrb[0].mxu0 %v97
    %v163 = vpop.f32.mrb[0].mxu0
    %v164 = vadd.f32 0.0, %v163
    %v165 = vpop.f32.mrb[0].mxu0
    %v166 = vpop.f32.mrb[0].mxu0
    %v167 = vadd.f32 0.0, %v166
    %v168 = vpop.f32.mrb[0].mxu0
    %169 = vmatprep.mubr.bf16.mxu0 0
    %170 = vmatmul.mubr.bf16.gmra.mrb[0].mxu0 %v100
    %v171 = vpop.f32.mrb[0].mxu0
    %v172 = vadd.f32 0.0, %v171
    %v173 = vpop.f32.mrb[0].mxu0
    %v174 = vpop.f32.mrb[0].mxu0
    %v175 = vadd.f32 0.0, %v174
    %v176 = vpop.f32.mrb[0].mxu0
    %177 = vmatprep.mubr.bf16.mxu0 0
    %178 = vmatmul.mubr.bf16.gmra.mrb[0].mxu0 %v103
    %v179 = vpop.f32.mrb[0].mxu0
    %v180 = vadd.f32 0.0, %v179
    %v181 = vpop.f32.mrb[0].mxu0
    %v182 = vpop.f32.mrb[0].mxu0
    %v183 = vadd.f32 0.0, %v182
    %v184 = vpop.f32.mrb[0].mxu0
    %185 = vmatprep.mubr.bf16.mxu0 0
    %186 = vmatmul.mubr.bf16.gmra.mrb[0].mxu0 %v106
    %v187 = vpop.f32.mrb[0].mxu0
    %v188 = vadd.f32 0.0, %v187
    %v189 = vpop.f32.mrb[0].mxu0
    %v190 = vpop.f32.mrb[0].mxu0
    %v191 = vadd.f32 0.0, %v190
    %v192 = vpop.f32.mrb[0].mxu0
    %193 = vmatprep.mubr.bf16.mxu0 0
    %194 = vmatmul.mubr.bf16.gmra.mrb[0].mxu0 %v109
    %v195 = vpop.f32.mrb[0].mxu0
    %v196 = vadd.f32 0.0, %v195
    %v197 = vpop.f32.mrb[0].mxu0
    %v198 = vpop.f32.mrb[0].mxu0
    %v199 = vadd.f32 0.0, %v198
    %v200 = vpop.f32.mrb[0].mxu0
    %201 = vmatprep.mubr.bf16.mxu0 0
    %202 = vmatmul.mubr.bf16.gmra.mrb[0].mxu0 %v112
    %v203 = vpop.f32.mrb[0].mxu0
    %v204 = vadd.f32 0.0, %v203
    %v205 = vpop.f32.mrb[0].mxu0
    %v206 = vpop.f32.mrb[0].mxu0
    %v207 = vadd.f32 0.0, %v206
    %v208 = vpop.f32.mrb[0].mxu0
    %209 = vmatprep.mubr.bf16.mxu0 0
    %210 = vmatmul.mubr.bf16.gmra.mrb[0].mxu0 %v115
    %v211 = vpop.f32.mrb[0].mxu0
    %v212 = vadd.f32 0.0, %v211
    %v213 = vpop.f32.mrb[0].mxu0
    %v214 = vpop.f32.mrb[0].mxu0
    %v215 = vadd.f32 0.0, %v214
    %v216 = vpop.f32.mrb[0].mxu0
    %217 = vdwg.mxu0
    %218 = vst [vmem:[#allocation2] sm:$0xff] %v156
    %219 = vst [vmem:[#allocation2 + $0x8] sm:$0xff] %v159
    %220 = vst [vmem:[#allocation2 + $0x10] sm:$0xff] %v164
    %221 = vst [vmem:[#allocation2 + $0x18] sm:$0xff] %v167
    %222 = vst [vmem:[#allocation2 + $0x20] sm:$0xff] %v172
    %223 = vst [vmem:[#allocation2 + $0x28] sm:$0xff] %v175
    %224 = vst [vmem:[#allocation2 + $0x30] sm:$0xff] %v180
    %225 = vst [vmem:[#allocation2 + $0x38] sm:$0xff] %v183
    %226 = vst [vmem:[#allocation2 + $0x40] sm:$0xff] %v188
    %227 = vst [vmem:[#allocation2 + $0x48] sm:$0xff] %v191
    %228 = vst [vmem:[#allocation2 + $0x50] sm:$0xff] %v196
    %229 = vst [vmem:[#allocation2 + $0x58] sm:$0xff] %v199
    %230 = vst [vmem:[#allocation2 + $0x60] sm:$0xff] %v204
    %231 = vst [vmem:[#allocation2 + $0x68] sm:$0xff] %v207
    %232 = vst [vmem:[#allocation2 + $0x70] sm:$0xff] %v212
    %233 = vst [vmem:[#allocation2 + $0x78] sm:$0xff] %v215
    %v234 = vadd.f32 %v156, %v159
    %v235 = vadd.f32 %v234, %v164
    %v236 = vadd.f32 %v235, %v167
    %v237 = vadd.f32 %v236, %v172
    %v238 = vadd.f32 %v237, %v175
    %v239 = vadd.f32 %v238, %v180
    %v240 = vadd.f32 %v239, %v183
    %v241 = vadd.f32 %v240, %v188
    %v242 = vadd.f32 %v241, %v191
    %v243 = vadd.f32 %v242, %v196
    %v244 = vadd.f32 %v243, %v199
    %v245 = vadd.f32 %v244, %v204
    %v246 = vadd.f32 %v245, %v207
    %v247 = vadd.f32 %v246, %v212
    %v248 = vadd.f32 %v247, %v215
    %v249 = vrot.slane %v248, 4
    %v250 = vadd.f32 %v248, %v249
    %v251 = vrot.slane %v250, 2
    %v252 = vadd.f32 %v250, %v251
    %v253 = vrot.slane %v252, 1
    %v254 = vadd.f32 %v252, %v253
    %v255 = vmul.f32 %v156, %v156
    %v256 = vmul.f32 %v159, %v159
    %v257 = vmul.f32 %v164, %v164
    %v258 = vmul.f32 %v167, %v167
    %v259 = vmul.f32 %v172, %v172
    %v260 = vmul.f32 %v175, %v175
    %v261 = vmul.f32 %v180, %v180
    %v262 = vmul.f32 %v183, %v183
    %v263 = vmul.f32 %v188, %v188
    %v264 = vmul.f32 %v191, %v191
    %v265 = vmul.f32 %v196, %v196
    %v266 = vmul.f32 %v199, %v199
    %v267 = vmul.f32 %v204, %v204
    %v268 = vmul.f32 %v207, %v207
    %v269 = vmul.f32 %v212, %v212
    %v270 = vmul.f32 %v215, %v215
    %v271 = vadd.f32 %v255, %v256
    %v272 = vadd.f32 %v271, %v257
    %v273 = vadd.f32 %v272, %v258
    %v274 = vadd.f32 %v273, %v259
    %v275 = vadd.f32 %v274, %v260
    %v276 = vadd.f32 %v275, %v261
    %v277 = vadd.f32 %v276, %v262
    %v278 = vadd.f32 %v277, %v263
    %v279 = vadd.f32 %v278, %v264
    %v280 = vadd.f32 %v279, %v265
    %v281 = vadd.f32 %v280, %v266
    %v282 = vadd.f32 %v281, %v267
    %v283 = vadd.f32 %v282, %v268
    %v284 = vadd.f32 %v283, %v269
    %v285 = vadd.f32 %v284, %v270
    %v286 = vrot.slane %v285, 4
    %v287 = vadd.f32 %v285, %v286
    %v288 = vrot.slane %v287, 2
    %v289 = vadd.f32 %v287, %v288
    %v290 = vrot.slane %v289, 1
    %v291 = vadd.f32 %v289, %v290
    %vm292 = vcmask 1040384
    %v293 = vsel %vm292, %v254, %v291
    %vm294 = vcmask 1041408
    %v295 = vsel %vm294, %v293, 0.0
    %296 = vst [vmem:[#allocation4] sm:$0xff] %v295
    // Predicated region
    $region10: #{tpu_custom_call.1} parent=1 // pred_check
      _
    $region11: #{tpu_custom_call.1} parent=1 // pred_check_branch
      %298 = sbr.rel (0) target = $region13
    $region12: #{tpu_custom_call.1} parent=1 // pred_region
      %s300 = ssub.s32 2048, 2048
      %301 = vsyncadd [#allocation3], %s300
      %s302 = sshll.u32 [#allocation2], 4
      %s303 = int_to_ptr.vmem [resolvable:$true] %s302
      %308 = dma.vmem_to_hbm [thread:$0]  %s303, 2048, %s2, [#allocation3], 128, 128, 8
    $region13: #{tpu_custom_call.1} parent=1 // pred_fallthru
      _
    // Predicated region
    $region14: #{tpu_custom_call.1} parent=1 // pred_check
      _
    $region15: #{tpu_custom_call.1} parent=1 // pred_check_branch
      %310 = sbr.rel (0) target = $region17
    $region16: #{tpu_custom_call.1} parent=1 // pred_region
      %s312 = ssub.s32 128, 128
      %313 = vsyncadd [#allocation5], %s312
      %s315 = sshll.u32 [#allocation4], 4
      %s316 = int_to_ptr.vmem [resolvable:$true] %s315
      %318 = dma.vmem_to_hbm [thread:$0]  %s316, 128, %s3, [#allocation5]
    $region17: #{tpu_custom_call.1} parent=1 // pred_fallthru
      _
    // Predicated region
    $region18: #{tpu_custom_call.1} parent=1 // pred_check
      _
    $region19: #{tpu_custom_call.1} parent=1 // pred_check_branch
      %320 = sbr.rel (0) target = $region21
    $region20: #{tpu_custom_call.1} parent=1 // pred_region
      %321 = dma.done [#allocation3], 2048
    $region21: #{tpu_custom_call.1} parent=1 // pred_fallthru
      _
    // Predicated region
    $region22: #{tpu_custom_call.1} parent=1 // pred_check
      _
    $region23: #{tpu_custom_call.1} parent=1 // pred_check_branch
      %323 = sbr.rel (0) target = $region25
    $region24: #{tpu_custom_call.1} parent=1 // pred_region
      %324 = dma.done [#allocation5], 128
    $region25: #{tpu_custom_call.1} parent=1 // pred_fallthru
      _
    %325 = vsyncpa [#allocation3], 1
    %326 = vsyncpa [#allocation5], 1

</llo_original>
